<compile_context>
chip_gen: v7x
topology: tpu7x:2x2x1
jax: 0.10.0
libtpu: 0.0.40
codegen_flags: <defaults>
</compile_context>

<pallas_src>
import functools

import jax
import jax.numpy as jnp
from jax import lax
from jax.experimental import pallas as pl
from jax.experimental.pallas import tpu as pltpu


def _round_up(x, m):
    return ((x + m - 1) // m) * m


# ----------------------------------------------------------------------------
# Kernel: tied-embedding LM head + online argmax over streamed vocab tiles
# ----------------------------------------------------------------------------
def _lm_head_argmax_kernel(hid_ref, emb_ref, max_ref, arg_ref, max_sc, arg_sc,
                           *, tv, v_valid, v_pad, split_vocab, voc_inner):
    k = pl.program_id(1)

    @pl.when(k == 0)
    def _init():
        max_sc[...] = jnp.full_like(max_sc, -jnp.inf)
        arg_sc[...] = jnp.zeros_like(arg_sc)

    # Global vocab-tile index of this grid step.
    if split_vocab:
        kg = pl.program_id(0) * voc_inner + k
    else:
        kg = k

    # [tv, H] bf16 @ [H, tn] bf16 -> [tv, tn] f32 (MXU, f32 accumulation).
    logits = jnp.dot(emb_ref[...], hid_ref[...],
                     preferred_element_type=jnp.float32)

    # Local (in-tile) vocab index along sublanes; the global offset kg*tv is
    # added to the reduced [1, tn] argmax instead of the full [tv, tn] tile.
    local = lax.broadcasted_iota(jnp.int32, logits.shape, 0)
    if v_pad != v_valid:                         # static: padding exists at all
        # Padded table rows only exist in the globally-last tile; elsewhere the
        # scalar limit is >= tv and the select is a no-op.
        logits = jnp.where(local < (v_valid - kg * tv), logits, -jnp.inf)

    tile_max = jnp.max(logits, axis=0, keepdims=True)              # [1, tn]
    big = jnp.iinfo(jnp.int32).max
    tile_arg = jnp.min(jnp.where(logits == tile_max, local, big),
                       axis=0, keepdims=True) + kg * tv            # [1, tn]

    # Online combine across vocab tiles.  Strict '>' keeps the earliest tile on
    # ties; with min-index-of-max in tile this reproduces torch/jnp argmax
    # first-occurrence semantics.
    better = tile_max > max_sc[...]
    arg_sc[...] = jnp.where(better, tile_arg, arg_sc[...])
    max_sc[...] = jnp.where(better, tile_max, max_sc[...])

    @pl.when(k == pl.num_programs(1) - 1)
    def _finalize():
        max_ref[0] = max_sc[...]                 # lane-dense [1, tn] stores
        arg_ref[0] = arg_sc[...]


def lm_head_greedy_ids(hidden_bf16, embed_bf16, *, tn=None, tv=256):
    """hidden_bf16: [N, H], embed_bf16: [V, H] (tied table). Returns ids [N] int32."""
    N, H = hidden_bf16.shape
    V, He = embed_bf16.shape
    assert H == He

    # Generation-aware VMEM budget (v7x has 64 MiB physical, v5e/v6e 128 MiB).
    try:
        vmem_phys = int(pltpu.get_tpu_info().vmem_capacity_bytes)
    except Exception:
        vmem_phys = 64 << 20
    vmem_cap = max(16 << 20, min((vmem_phys * 5) // 8, 100 << 20))

    # ---- Vocab (V) tiling: tv rides the (bf16) sublane axis of the table tile.
    tv = max(128, _round_up(min(tv, _round_up(V, 128)), 128))
    v_pad = _round_up(V, tv)
    n_voc_tiles = v_pad // tv

    # ---- Row (N) tiling: pad to >=256 lanes (full-lane MXU, unmasked stores).
    n_pad_min = max(256, _round_up(N, 128))
    if tn is None:
        # If hidden^T fits comfortably in VMEM, take the whole row range as one
        # tile so the [V, H] table is streamed from HBM exactly once.
        resident_bytes = (2 * H * n_pad_min * 2      # hidden^T (2 bufs, bf16)
                          + 2 * tv * H * 2           # embed tile (2 bufs, bf16)
                          + 3 * tv * n_pad_min * 4)  # f32 logits + temporaries
        tn = n_pad_min if resident_bytes <= (3 * vmem_cap) // 4 else 512
    tn = max(128, _round_up(min(tn, n_pad_min), 128))
    n_pad = _round_up(n_pad_min, tn)
    n_row_tiles = n_pad // tn

    # ---- Optional vocab split across the leading parallel axis (both TCs on
    # v7x stream half the table each when rows give no parallelism).
    split_vocab = (n_row_tiles == 1) and (n_voc_tiles >= 2)
    if split_vocab:
        v_pad = _round_up(v_pad, 2 * tv)
        n_voc_tiles = v_pad // tv
        n_par, voc_inner = 2, n_voc_tiles // 2
    else:
        n_par, voc_inner = n_row_tiles, n_voc_tiles

    # Pre-transpose hidden once ([H, N]): canonical MXU feed, lane-dense output.
    hid_t = hidden_bf16.T
    if n_pad != N:
        hid_t = jnp.pad(hid_t, ((0, 0), (0, n_pad - N)))
    emb = embed_bf16
    if v_pad != V:
        emb = jnp.pad(emb, ((0, v_pad - V), (0, 0)))  # padded rows masked in-kernel

    kernel = functools.partial(_lm_head_argmax_kernel, tv=tv, v_valid=V,
                               v_pad=v_pad, split_vocab=split_vocab,
                               voc_inner=voc_inner)

    if split_vocab:
        hid_map = lambda c, k: (0, 0)
        emb_map = lambda c, k: (c * voc_inner + k, 0)
    else:
        hid_map = lambda i, k: (0, i)
        emb_map = lambda i, k: (k, 0)
    out_map = lambda i, k: (i, 0, 0)

    # Exact VMEM accounting (+25% headroom), generation-aware cap.
    vmem_bytes = (2 * tv * H * 2        # embed tile, double-buffered bf16
                  + 2 * H * tn * 2      # hidden^T tile, double-buffered bf16
                  + 3 * tv * tn * 4     # f32 logits tile + live temporaries
                  + 2 * tn * 4          # running max/arg scratch
                  + 2 * 2 * tn * 4)     # two (1,1,tn) output blocks, 2 bufs
    vmem_limit = int(min(max(int(vmem_bytes * 1.25), 16 << 20), vmem_cap))

    flops = 2 * n_pad * H * v_pad
    table_reads = 1 if split_vocab else n_row_tiles
    hid_reads = n_par if split_vocab else 1
    bytes_accessed = (table_reads * v_pad * H * 2
                      + hid_reads * n_pad * H * 2
                      + 2 * n_par * tn * 4)

    max_p, arg_p = pl.pallas_call(
        kernel,
        out_shape=(jax.ShapeDtypeStruct((n_par, 1, tn), jnp.float32),
                   jax.ShapeDtypeStruct((n_par, 1, tn), jnp.int32)),
        grid_spec=pltpu.PrefetchScalarGridSpec(
            num_scalar_prefetch=0,
            grid=(n_par, voc_inner),               # vocab = trailing reduction axis
            in_specs=[
                pl.BlockSpec((H, tn), hid_map),    # hidden^T tile
                pl.BlockSpec((tv, H), emb_map),    # embed-table tile (streamed)
            ],
            out_specs=[pl.BlockSpec((1, 1, tn), out_map),
                       pl.BlockSpec((1, 1, tn), out_map)],
            scratch_shapes=[pltpu.VMEM((1, tn), jnp.float32),   # running max
                            pltpu.VMEM((1, tn), jnp.int32)],    # running argmax
        ),
        compiler_params=pltpu.CompilerParams(
            dimension_semantics=("parallel", "arbitrary"),
            vmem_limit_bytes=vmem_limit),
        cost_estimate=pl.CostEstimate(flops=flops, transcendentals=0,
                                      bytes_accessed=bytes_accessed),
    )(hid_t, emb)

    if split_vocab:
        # Combine the two per-core partials; '>=' keeps the lower vocab half on
        # ties (core 0 owns the lower indices) -> first-occurrence argmax.
        m0, m1 = max_p[0, 0], max_p[1, 0]
        a0, a1 = arg_p[0, 0], arg_p[1, 0]
        ids = jnp.where(m0 >= m1, a0, a1)
    else:
        ids = arg_p[:, 0, :].reshape(-1)
    return ids.reshape(-1)[:N]


# ----------------------------------------------------------------------------
# Params prep (one-time) + one "evaluation step" (the evaluator's inner loop)
# ----------------------------------------------------------------------------
def prepare_dialect_clip_params(params):
    """One-time: cache a bf16 copy of the tied embedding / LM-head table so the
    full V*H f32->bf16 HBM cast pass is not re-done on every eval step."""
    p = dict(params)
    p["embed_table_bf16"] = params["embed_table"].astype(jnp.bfloat16)
    return p


def dialect_clip_eval_step(input_ids, dialect_feats, params,
                           speech_token_position=0, *, tn=None, tv=256):
    """Returns generate_ids [B, L] int32 (greedy decode over all positions)."""
    B, L = input_ids.shape
    embed_bf = params["embed_table_bf16"]                  # [V, H] bf16, cached

    # 1. Speech encoder: mean-pool over time + linear projection + tanh.
    #    Left to XLA (tiny contraction; a separate pallas_call costs more).
    pooled = jnp.mean(dialect_feats.astype(jnp.float32), axis=-1)            # [B, n_mels]
    speech_emb = jnp.tanh(pooled @ params["w_speech"] + params["b_speech"])  # [B, H]

    # 2. Prompt embedding lookup (directly from the bf16 table: no per-step
    #    cast pass) + merge speech embedding at the <AUDIO> position.
    text_embeds = jnp.take(embed_bf, input_ids, axis=0)                      # [B, L, H] bf16
    hidden = text_embeds.at[:, speech_token_position, :].set(
        speech_emb.astype(jnp.bfloat16))

    # 3. Tied-embedding LM head + greedy decode (Pallas kernel).
    ids = lm_head_greedy_ids(hidden.reshape(B * L, -1), embed_bf, tn=tn, tv=tv)
    return ids.reshape(B, L)


# ----------------------------------------------------------------------------
# main
# ----------------------------------------------------------------------------
if __name__ == "__main__":
    # Small shapes consistent with the forward pass.  V is deliberately NOT a
    # multiple of the vocab tile so padded-vocab masking is exercised, and
    # small enough that the split-across-cores path triggers (4 vocab tiles,
    # single row tile -> 2 tiles per parallel-axis half).
    B, n_mels, T = 2, 16, 32      # dialect mel-feature batch
    L, H, V = 8, 32, 456          # prompt length, hidden size, vocab size

    key = jax.random.PRNGKey(0)
    k_w, k_e, k_ids, k_feat, k_h2 = jax.random.split(key, 5)

    params = {
        "w_speech": 0.02 * jax.random.normal(k_w, (n_mels, H), jnp.float32),
        "b_speech": jnp.zeros((1, H), jnp.float32),
        "embed_table": 0.02 * jax.random.normal(k_e, (V, H), jnp.float32),
    }
    params = prepare_dialect_clip_params(params)     # bf16 table cached once

    input_ids = jax.random.randint(k_ids, (B, L), 0, V, dtype=jnp.int32)
    dialect_feats = jax.random.normal(k_feat, (B, n_mels, T), jnp.float32)

    # Path 1: full eval step.  tv=128 -> 4 vocab tiles, single row tile ->
    # vocab split across the parallel axis + online argmax + padded-row mask.
    step = jax.jit(functools.partial(dialect_clip_eval_step, tv=128))
    generate_ids = step(input_ids, dialect_feats, params)
    jax.block_until_ready(generate_ids)

    # Pure-JAX reference of the same math (same bf16 rounding before matmul).
    pooled = jnp.mean(dialect_feats, axis=-1)
    sp_ref = jnp.tanh(pooled @ params["w_speech"] + params["b_speech"])
    te_ref = jnp.take(params["embed_table"], input_ids, axis=0)
    hid_ref = te_ref.at[:, 0, :].set(sp_ref)
    log_ref = jnp.einsum(
        "blh,vh->blv",
        hid_ref.astype(jnp.bfloat16),
        params["embed_table"].astype(jnp.bfloat16),
        preferred_element_type=jnp.float32)
    ids_ref = jnp.argmax(log_ref, axis=-1).astype(jnp.int32)
    assert jnp.array_equal(generate_ids, ids_ref)

    # Path 2: multi-row-tile path (N > tn) of the LM-head kernel.
    N2 = 384
    hid2 = (0.02 * jax.random.normal(k_h2, (N2, H), jnp.float32)).astype(jnp.bfloat16)
    ids2 = jax.jit(functools.partial(lm_head_greedy_ids, tn=128, tv=128))(
        hid2, params["embed_table_bf16"])
    jax.block_until_ready(ids2)
    log2 = jnp.dot(hid2, params["embed_table_bf16"].T,
                   preferred_element_type=jnp.float32)
    ids2_ref = jnp.argmax(log2, axis=-1).astype(jnp.int32)
    assert jnp.array_equal(ids2, ids2_ref)

    print("KERNEL_OK")
</pallas_src>

<mosaic_0001>
module attributes {stable_mosaic.version = 11 : i64} {
  func.func @_lm_head_argmax_kernel(%arg0: i32, %arg1: i32, %arg2: memref<32x256xbf16, #tpu.memory_space<vmem>>, %arg3: memref<128x32xbf16, #tpu.memory_space<vmem>>, %arg4: memref<1x1x256xf32, #tpu.memory_space<vmem>>, %arg5: memref<1x1x256xi32, #tpu.memory_space<vmem>>, %arg6: memref<1x256xf32, #tpu.memory_space<vmem>>, %arg7: memref<1x256xi32, #tpu.memory_space<vmem>>) attributes {dimension_semantics = [#tpu.dimension_semantics<parallel>, #tpu.dimension_semantics<arbitrary>], iteration_bounds = array<i64: 2, 2>, scalar_prefetch = 0 : i64, scratch_operands = 2 : i64, tpu.core_type = #tpu.core_type<tc>, window_params = [{pipeline_mode = #tpu.pipeline_mode<synchronous>, transform_indices = @transform_0, window_bounds = array<i64: 32, 256>}, {transform_indices = @transform_1, window_bounds = array<i64: 128, 32>}, {transform_indices = @transform_2, window_bounds = array<i64: 1, 1, 256>}, {transform_indices = @transform_3, window_bounds = array<i64: 1, 1, 256>}]} {
    %c0_i32 = arith.constant 0 : i32
    %0 = arith.cmpi eq, %arg1, %c0_i32 : i32
    %1 = arith.extui %0 : i1 to i32
    %c0_i32_0 = arith.constant 0 : i32
    %2 = arith.cmpi ne, %1, %c0_i32_0 : i32
    scf.if %2 {
      %cst_19 = arith.constant 0xFF800000 : f32
      %37 = vector.broadcast %cst_19 : f32 to vector<1x256xf32>
      %c0_20 = arith.constant 0 : index
      %c0_21 = arith.constant 0 : index
      %38 = vector.load %arg6[%c0_20, %c0_21] : memref<1x256xf32, #tpu.memory_space<vmem>>, vector<1x256xf32>
      tpu.vector_store %arg6[%c0_20, %c0_21], %37 {strides = array<i32>} : memref<1x256xf32, #tpu.memory_space<vmem>>, vector<1x256xf32>,
      %c0_i32_22 = arith.constant 0 : i32
      %39 = vector.broadcast %c0_i32_22 : i32 to vector<1x256xi32>
      %c0_23 = arith.constant 0 : index
      %c0_24 = arith.constant 0 : index
      %40 = vector.load %arg7[%c0_23, %c0_24] : memref<1x256xi32, #tpu.memory_space<vmem>>, vector<1x256xi32>
      tpu.vector_store %arg7[%c0_23, %c0_24], %39 {strides = array<i32>} : memref<1x256xi32, #tpu.memory_space<vmem>>, vector<1x256xi32>,
    } else {
    }
    %c2_i32 = arith.constant 2 : i32
    %3 = arith.muli %arg0, %c2_i32 : i32
    %4 = arith.addi %3, %arg1 : i32
    %c0 = arith.constant 0 : index
    %c0_1 = arith.constant 0 : index
    %5 = vector.load %arg3[%c0, %c0_1] : memref<128x32xbf16, #tpu.memory_space<vmem>>, vector<128x32xbf16>
    %c0_2 = arith.constant 0 : index
    %c0_3 = arith.constant 0 : index
    %6 = vector.load %arg2[%c0_2, %c0_3] : memref<32x256xbf16, #tpu.memory_space<vmem>>, vector<32x256xbf16>
    %cst = arith.constant dense<0.000000e+00> : vector<128x256xf32>
    %7 = tpu.matmul %5, %6, %cst {dimension_numbers = #tpu.dot_dimension_numbers<[1], [0], [0], [1], [0, 0, 1, 1], [], []>} : vector<128x32xbf16>, vector<32x256xbf16>, vector<128x256xf32> -> vector<128x256xf32>
    %8 = tpu.iota {dimensions = array<i32: 0>} : vector<128x256xi32>
    %c128_i32 = arith.constant 128 : i32
    %9 = arith.muli %4, %c128_i32 : i32
    %c456_i32 = arith.constant 456 : i32
    %10 = arith.subi %c456_i32, %9 : i32
    %11 = vector.broadcast %10 : i32 to vector<128x256xi32>
    %12 = arith.cmpi slt, %8, %11 : vector<128x256xi32>
    %cst_4 = arith.constant 0xFF800000 : f32
    %13 = vector.broadcast %cst_4 : f32 to vector<128x256xf32>
    %14 = arith.select %12, %7, %13 : vector<128x256xi1>, vector<128x256xf32>
    %cst_5 = arith.constant dense<0xFF800000> : vector<256xf32>
    %15 = vector.multi_reduction <maximumf>, %14, %cst_5 [0] : vector<128x256xf32> to vector<256xf32>
    %16 = vector.shape_cast %15 : vector<256xf32> to vector<1x256xf32>
    %17 = vector.broadcast %16 : vector<1x256xf32> to vector<128x256xf32>
    %18 = arith.cmpf oeq, %14, %17 : vector<128x256xf32>
    %c2147483647_i32 = arith.constant 2147483647 : i32
    %19 = vector.broadcast %c2147483647_i32 : i32 to vector<128x256xi32>
    %20 = arith.select %18, %8, %19 : vector<128x256xi1>, vector<128x256xi32>
    %cst_6 = arith.constant dense<2147483647> : vector<256xi32>
    %21 = vector.multi_reduction <minsi>, %20, %cst_6 [0] : vector<128x256xi32> to vector<256xi32>
    %22 = vector.shape_cast %21 : vector<256xi32> to vector<1x256xi32>
    %c128_i32_7 = arith.constant 128 : i32
    %23 = arith.muli %4, %c128_i32_7 : i32
    %24 = vector.broadcast %23 : i32 to vector<1x256xi32>
    %25 = arith.addi %22, %24 : vector<1x256xi32>
    %c0_8 = arith.constant 0 : index
    %c0_9 = arith.constant 0 : index
    %26 = vector.load %arg6[%c0_8, %c0_9] : memref<1x256xf32, #tpu.memory_space<vmem>>, vector<1x256xf32>
    %27 = arith.cmpf ogt, %16, %26 : vector<1x256xf32>
    %c0_10 = arith.constant 0 : index
    %c0_11 = arith.constant 0 : index
    %28 = vector.load %arg7[%c0_10, %c0_11] : memref<1x256xi32, #tpu.memory_space<vmem>>, vector<1x256xi32>
    %29 = arith.select %27, %25, %28 : vector<1x256xi1>, vector<1x256xi32>
    %c0_12 = arith.constant 0 : index
    %c0_13 = arith.constant 0 : index
    %30 = vector.load %arg7[%c0_12, %c0_13] : memref<1x256xi32, #tpu.memory_space<vmem>>, vector<1x256xi32>
    tpu.vector_store %arg7[%c0_12, %c0_13], %29 {strides = array<i32>} : memref<1x256xi32, #tpu.memory_space<vmem>>, vector<1x256xi32>,
    %c0_14 = arith.constant 0 : index
    %c0_15 = arith.constant 0 : index
    %31 = vector.load %arg6[%c0_14, %c0_15] : memref<1x256xf32, #tpu.memory_space<vmem>>, vector<1x256xf32>
    %32 = arith.select %27, %16, %31 : vector<1x256xi1>, vector<1x256xf32>
    %c0_16 = arith.constant 0 : index
    %c0_17 = arith.constant 0 : index
    %33 = vector.load %arg6[%c0_16, %c0_17] : memref<1x256xf32, #tpu.memory_space<vmem>>, vector<1x256xf32>
    tpu.vector_store %arg6[%c0_16, %c0_17], %32 {strides = array<i32>} : memref<1x256xf32, #tpu.memory_space<vmem>>, vector<1x256xf32>,
    %c1_i32 = arith.constant 1 : i32
    %34 = arith.cmpi eq, %arg1, %c1_i32 : i32
    %35 = arith.extui %34 : i1 to i32
    %c0_i32_18 = arith.constant 0 : i32
    %36 = arith.cmpi ne, %35, %c0_i32_18 : i32
    scf.if %36 {
      %c0_19 = arith.constant 0 : index
      %c0_20 = arith.constant 0 : index
      %37 = vector.load %arg6[%c0_19, %c0_20] : memref<1x256xf32, #tpu.memory_space<vmem>>, vector<1x256xf32>
      %c0_21 = arith.constant 0 : index
      %c0_22 = arith.constant 0 : index
      %c0_23 = arith.constant 0 : index
      %38 = vector.load %arg4[%c0_21, %c0_22, %c0_23] : memref<1x1x256xf32, #tpu.memory_space<vmem>>, vector<1x1x256xf32>
      %39 = vector.shape_cast %38 : vector<1x1x256xf32> to vector<1x256xf32>
      %40 = vector.shape_cast %37 : vector<1x256xf32> to vector<1x1x256xf32>
      tpu.vector_store %arg4[%c0_21, %c0_22, %c0_23], %40 {strides = array<i32>} : memref<1x1x256xf32, #tpu.memory_space<vmem>>, vector<1x1x256xf32>,
      %c0_24 = arith.constant 0 : index
      %c0_25 = arith.constant 0 : index
      %41 = vector.load %arg7[%c0_24, %c0_25] : memref<1x256xi32, #tpu.memory_space<vmem>>, vector<1x256xi32>
      %c0_26 = arith.constant 0 : index
      %c0_27 = arith.constant 0 : index
      %c0_28 = arith.constant 0 : index
      %42 = vector.load %arg5[%c0_26, %c0_27, %c0_28] : memref<1x1x256xi32, #tpu.memory_space<vmem>>, vector<1x1x256xi32>
      %43 = vector.shape_cast %42 : vector<1x1x256xi32> to vector<1x256xi32>
      %44 = vector.shape_cast %41 : vector<1x256xi32> to vector<1x1x256xi32>
      tpu.vector_store %arg5[%c0_26, %c0_27, %c0_28], %44 {strides = array<i32>} : memref<1x1x256xi32, #tpu.memory_space<vmem>>, vector<1x1x256xi32>,
    } else {
    }
    return
  }
  func.func @transform_0(%arg0: i32, %arg1: i32) -> (i32, i32) {
    %c0_i32 = arith.constant 0 : i32
    %c0_i32_0 = arith.constant 0 : i32
    %c0_i32_1 = arith.constant 0 : i32
    return %c0_i32, %c0_i32_0 : i32, i32
  }
  func.func @transform_1(%arg0: i32, %arg1: i32) -> (i32, i32) {
    %c2_i32 = arith.constant 2 : i32
    %0 = arith.muli %arg0, %c2_i32 : i32
    %1 = arith.addi %0, %arg1 : i32
    %c0_i32 = arith.constant 0 : i32
    %c0_i32_0 = arith.constant 0 : i32
    return %1, %c0_i32 : i32, i32
  }
  func.func @transform_2(%arg0: i32, %arg1: i32) -> (i32, i32, i32) {
    %c0_i32 = arith.constant 0 : i32
    %c0_i32_0 = arith.constant 0 : i32
    %c0_i32_1 = arith.constant 0 : i32
    return %arg0, %c0_i32, %c0_i32_0 : i32, i32, i32
  }
  func.func @transform_3(%arg0: i32, %arg1: i32) -> (i32, i32, i32) {
    %c0_i32 = arith.constant 0 : i32
    %c0_i32_0 = arith.constant 0 : i32
    %c0_i32_1 = arith.constant 0 : i32
    return %arg0, %c0_i32, %c0_i32_0 : i32, i32, i32
  }
}

</mosaic_0001>

<llo_original>
// kernel: dialect_clip_eval_step.1
$region0: #{dialect_clip_eval_step.1}
  #allocation0 [shape = 'u32[]', space=smem, size = 0x4, offset = 0x4, fixed_abs, tag = 'smem constant byte address 0x4 - core index']
  #allocation1 [shape = 'u32[144,128]{1,0:T(1,128)}', space=vmem, size = 0x12000, scoped, tag = 'internal scratch']
  #allocation2 [shape = 'f32[1,256]{1,0:T(1,128)}', space=vmem, size = 0x400, scoped, tag = 'scratch operand']
  #allocation3 [shape = 's32[1,256]{1,0:T(1,128)}', space=vmem, size = 0x400, scoped, tag = 'scratch operand']
  %s0 = inlined_call_operand.vmem [shape: bf16[32,256], index: 0, kind: input, shape index: {}]
  %s1 = inlined_call_operand.vmem [shape: bf16[512,32], index: 1, kind: input, shape index: {}]
  %s2 = inlined_call_operand.vmem [shape: f32[2,1,256], index: 2, kind: output, shape index: {0}]
  %s3 = inlined_call_operand.vmem [shape: s32[2,1,256], index: 3, kind: output, shape index: {1}]
  %4 = xla_tuple %s2, %s3
  %s5 = sld [smem:[#allocation0]]
  $region57: #{dialect_clip_eval_step.1} parent=0
    _
  %s7 = ssub.s32 1, %s5
  %s8 = scalar_select 0, %s7, %s5
  loop: start=0, step=1, limit=6
  $region2: #{dialect_clip_eval_step.1} parent=0 // loop_pre_header
    _
  $region3: #{dialect_clip_eval_step.1} parent=0 // loop_header
    %s10 = sphi 0, %s14
    %p11 = scmp.ge.s32.totalorder %s10, 6
    %s17 = sphi 0, %s29
    %s18 = sphi 0, %s25
    %s19 = sphi 0, %s17
    %s20 = sphi 0, %s18
    %s21 = sphi 0, %s19
    %s22 = sphi 0, %s20
    %s30 = sphi 0, %s30
    %s32 = sphi 0, %s30
    %s33 = sphi 0, %s32
    %s47 = sphi 0, %s33
    %s57 = sphi 0, %s59
    %s60 = sphi 0, %s57
    %s61 = sphi 0, %s60
    %s77 = sphi 0, %s61
    %s83 = sphi 0, %s85
    %s86 = sphi 0, %s83
    %s87 = sphi 0, %s86
    %s103 = sphi 0, %s87
    %s109 = sphi 0, %s111
    %s112 = sphi 0, %s109
    %s113 = sphi 0, %s112
    %s129 = sphi 0, %s113
  $region4: #{dialect_clip_eval_step.1} parent=0 // loop_header_branch
    %13 = sbr.rel (%p11) target = $region8
  $region5: #{dialect_clip_eval_step.1} parent=0 // loop_body
    %s15 = ssub.s32 %s10, 1
    %s16 = ssub.s32 %s10, 2
    %s23 = sadd.s32 1, %s18
    %p24 = scmp.ge.s32.totalorder %s23, 2
    %s25 = scalar_select %p24, 0, %s23
    %s26 = sadd.s32 1, %s17
    %s27 = scalar_select %p24, %s26, %s17
    %p28 = scmp.ge.s32.totalorder %s27, 2
    %s29 = scalar_select %p28, 0, %s27
    %s31 = sadd.s32 %s30, 1
    %p34 = scmp.eq.s32.totalorder %s10, 3
    %p35 = scmp.ne.s32.totalorder %s30, %s32
    %p36 = scmp.eq.s32.totalorder %s10, 0
    %p37 = por %p35, %p36
    %p38 = scmp.ne.s32.totalorder %s30, %s32
    %p39 = scmp.eq.s32.totalorder %s15, 3
    %p40 = por %p38, %p39
    %p41 = scmp.ne.s32.totalorder %s32, %s33
    %p42 = scmp.eq.s32.totalorder %s15, 0
    %p43 = por %p41, %p42
    %p44 = scmp.ne.s32.totalorder %s32, %s33
    %p45 = scmp.eq.s32.totalorder %s16, 3
    %p46 = por %p44, %p45
    %p48 = scmp.ne.s32.totalorder %s33, %s47
    %p49 = scmp.eq.s32.totalorder %s16, 0
    %p50 = por %p48, %p49
    %s51 = smul.u32 %s17, 2
    %s52 = sadd.s32 %s51, %s18
    %s53 = smul.u32 %s29, 2
    %s54 = sadd.s32 %s53, %s25
    %s55 = ssub.s32 %s52, %s54
    %p56 = scmp.eq.s32.totalorder %s55, 0
    %s58 = sadd.s32 %s57, 1
    %s59 = scalar_select %p56, %s57, %s58
    %p62 = pneg %p56
    %p63 = scmp.eq.s32.totalorder %s10, 3
    %p64 = por %p62, %p63
    %p65 = scmp.ne.s32.totalorder %s57, %s60
    %p66 = scmp.eq.s32.totalorder %s10, 0
    %p67 = por %p65, %p66
    %p68 = scmp.ne.s32.totalorder %s57, %s60
    %p69 = scmp.eq.s32.totalorder %s15, 3
    %p70 = por %p68, %p69
    %p71 = scmp.ne.s32.totalorder %s60, %s61
    %p72 = scmp.eq.s32.totalorder %s15, 0
    %p73 = por %p71, %p72
    %p74 = scmp.ne.s32.totalorder %s60, %s61
    %p75 = scmp.eq.s32.totalorder %s16, 3
    %p76 = por %p74, %p75
    %p78 = scmp.ne.s32.totalorder %s61, %s77
    %p79 = scmp.eq.s32.totalorder %s16, 0
    %p80 = por %p78, %p79
    %s81 = ssub.s32 %s17, %s29
    %p82 = scmp.eq.s32.totalorder %s81, 0
    %s84 = sadd.s32 %s83, 1
    %s85 = scalar_select %p82, %s83, %s84
    %p88 = pneg %p82
    %p89 = scmp.eq.s32.totalorder %s10, 3
    %p90 = por %p88, %p89
    %p91 = scmp.ne.s32.totalorder %s83, %s86
    %p92 = scmp.eq.s32.totalorder %s10, 0
    %p93 = por %p91, %p92
    %p94 = scmp.ne.s32.totalorder %s83, %s86
    %p95 = scmp.eq.s32.totalorder %s15, 3
    %p96 = por %p94, %p95
    %p97 = scmp.ne.s32.totalorder %s86, %s87
    %p98 = scmp.eq.s32.totalorder %s15, 0
    %p99 = por %p97, %p98
    %p100 = scmp.ne.s32.totalorder %s86, %s87
    %p101 = scmp.eq.s32.totalorder %s16, 3
    %p102 = por %p100, %p101
    %p104 = scmp.ne.s32.totalorder %s87, %s103
    %p105 = scmp.eq.s32.totalorder %s16, 0
    %p106 = por %p104, %p105
    %s107 = ssub.s32 %s17, %s29
    %p108 = scmp.eq.s32.totalorder %s107, 0
    %s110 = sadd.s32 %s109, 1
    %s111 = scalar_select %p108, %s109, %s110
    %p114 = pneg %p108
    %p115 = scmp.eq.s32.totalorder %s10, 3
    %p116 = por %p114, %p115
    %p117 = scmp.ne.s32.totalorder %s109, %s112
    %p118 = scmp.eq.s32.totalorder %s10, 0
    %p119 = por %p117, %p118
    %p120 = scmp.ne.s32.totalorder %s109, %s112
    %p121 = scmp.eq.s32.totalorder %s15, 3
    %p122 = por %p120, %p121
    %p123 = scmp.ne.s32.totalorder %s112, %s113
    %p124 = scmp.eq.s32.totalorder %s15, 0
    %p125 = por %p123, %p124
    %p126 = scmp.ne.s32.totalorder %s112, %s113
    %p127 = scmp.eq.s32.totalorder %s16, 3
    %p128 = por %p126, %p127
    %p130 = scmp.ne.s32.totalorder %s113, %s129
    %p131 = scmp.eq.s32.totalorder %s16, 0
    %p132 = por %p130, %p131
    %p133 = scmp.le.s32.totalorder 1, %s10
    %p134 = scmp.lt.s32.totalorder %s10, 5
    %p135 = pnand %p133, %p134
    %p136 = pneg %p135
    // Predicated region
    $region9: #{dialect_clip_eval_step.1} parent=5 // pred_check
      _
    $region10: #{dialect_clip_eval_step.1} parent=5 // pred_check_branch
      %138 = sbr.rel (%p135) target = $region12
    $region11: #{dialect_clip_eval_step.1} parent=5 // pred_region
      %s139 = ssub.s32 %s10, 1
      // Predicated region
      $region13: #{dialect_clip_eval_step.1} parent=11 // pred_check
        %p140 = pneg %p43
      $region14: #{dialect_clip_eval_step.1} parent=11 // pred_check_branch
        %142 = sbr.rel (%p140) target = $region16
      $region15: #{dialect_clip_eval_step.1} parent=11 // pred_region
        _
      $region16: #{dialect_clip_eval_step.1} parent=11 // pred_fallthru
        _
    $region12: #{dialect_clip_eval_step.1} parent=5 // pred_fallthru
      _
    %p143 = scmp.lt.s32.totalorder %s10, 4
    // Predicated region
    $region17: #{dialect_clip_eval_step.1} parent=5 // pred_check
      %p144 = pneg %p143
    $region18: #{dialect_clip_eval_step.1} parent=5 // pred_check_branch
      %146 = sbr.rel (%p144) target = $region20
    $region19: #{dialect_clip_eval_step.1} parent=5 // pred_region
      // Predicated region
      $region21: #{dialect_clip_eval_step.1} parent=19 // pred_check
        %p147 = pneg %p67
      $region22: #{dialect_clip_eval_step.1} parent=19 // pred_check_branch
        %149 = sbr.rel (%p147) target = $region24
      $region23: #{dialect_clip_eval_step.1} parent=19 // pred_region
        %s150 = smul.u32 %s17, 2
        %s151 = sadd.s32 %s150, %s18
        %s152 = smul.u32 16, %s151
        %p153 = scmp.lt.s32.totalorder %s152, 63
        %s154 = scalar_select %p153, %s152, 63
        %s155 = smul.addr %s154, 4
        %s156 = scalar_lea.vmem %s1, %s155
        %s157 = smul.u32 %s17, 2
        %s158 = sadd.s32 %s157, %s18
        %s159 = smul.u32 16, %s158
      $region24: #{dialect_clip_eval_step.1} parent=19 // pred_fallthru
        _
    $region20: #{dialect_clip_eval_step.1} parent=5 // pred_fallthru
      _
    %p160 = scmp.le.s32.totalorder 1, %s10
    %p161 = scmp.lt.s32.totalorder %s10, 5
    %p162 = pnand %p160, %p161
    %p163 = pneg %p162
    // Predicated region
    $region25: #{dialect_clip_eval_step.1} parent=5 // pred_check
      _
    $region26: #{dialect_clip_eval_step.1} parent=5 // pred_check_branch
      %165 = sbr.rel (%p162) target = $region28
    $region27: #{dialect_clip_eval_step.1} parent=5 // pred_region
      %s166 = ssub.s32 %s10, 1
      %p167 = pneg %p43
      %p168 = pneg %p40
      %s169 = smul.u32 %s19, 2
      %s170 = sadd.s32 %s169, %s20
      %s171 = smul.u32 16, %s170
      %p172 = scmp.lt.s32.totalorder %s171, 63
      %s173 = scalar_select %p172, %s171, 63
      %s174 = smul.addr %s173, 4
      %s175 = scalar_lea.vmem %s1, %s174
      %p176 = pneg %p73
      %p177 = pneg %p70
      %p178 = pneg %p99
      %p179 = pneg %p96
      %p180 = scmp.lt.s32.totalorder %s19, 1
      %s181 = scalar_select %p180, %s19, 1
      %s182 = smul.addr %s181, 2
      %s183 = scalar_lea.vmem %s2, %s182
      %p184 = pneg %p125
      %p185 = pneg %p122
      %p186 = scmp.lt.s32.totalorder %s19, 1
      %s187 = scalar_select %p186, %s19, 1
      %s188 = smul.addr %s187, 2
      %s189 = scalar_lea.vmem %s3, %s188
      %s190 = smul.u32 %s19, 2
      %s191 = sadd.s32 %s190, %s20
      %s192 = smul.u32 16, %s191
      %p193 = scmp.lt.s32.totalorder %s192, 63
      %s194 = scalar_select %p193, %s192, 63
      %s195 = smul.addr %s194, 4
      %s196 = scalar_lea.vmem %s1, %s195
      %s197 = smul.u32 %s19, 2
      %s198 = sadd.s32 %s197, %s20
      %s199 = smul.u32 16, %s198
      %p200 = scmp.lt.s32.totalorder %s19, 1
      %s201 = scalar_select %p200, %s19, 1
      %s202 = smul.addr %s201, 2
      %s203 = scalar_lea.vmem %s2, %s202
      %p204 = scmp.lt.s32.totalorder %s19, 1
      %s205 = scalar_select %p204, %s19, 1
      %s206 = smul.addr %s205, 2
      %s207 = scalar_lea.vmem %s3, %s206
      %p209 = scmp.eq.s32.totalorder %s20, 0
      // Predicated region
      $region29: #{dialect_clip_eval_step.1} parent=27 // pred_check
        %p210 = pneg %p209
      $region30: #{dialect_clip_eval_step.1} parent=27 // pred_check_branch
        %212 = sbr.rel (%p210) target = $region32
      $region31: #{dialect_clip_eval_step.1} parent=27 // pred_region
        %v213 = vlaneseq
        %vm214 = vcmp.ge.s32.totalorder %v213, 0
        %vm215 = vcmp.lt.s32.totalorder %v213, 256
        %vm216 = vmand %vm214, %vm215
        %217 = vst.msk [vmem:[#allocation2] sm:$0x3] %vm216, -inf
        %218 = vst.msk [vmem:[#allocation3] sm:$0x3] %vm216, 0
      $region32: #{dialect_clip_eval_step.1} parent=27 // pred_fallthru
        _
      %s219 = smul.u32 %s19, 2
      %s220 = sadd.s32 %s219, %s20
      %v221 = vld [vmem:[%s196] sm:$0xf]
      %v222 = vld [vmem:[%s196 + $0x4] sm:$0xf]
      %v223 = vld [vmem:[%s196 + $0x8] sm:$0xf]
      %v224 = vld [vmem:[%s196 + $0xc] sm:$0xf]
      %v225 = vld [vmem:[%s196 + $0x10] sm:$0xf]
      %v226 = vld [vmem:[%s196 + $0x14] sm:$0xf]
      %v227 = vld [vmem:[%s196 + $0x18] sm:$0xf]
      %v228 = vld [vmem:[%s196 + $0x1c] sm:$0xf]
      %v229 = vld [vmem:[%s196 + $0x20] sm:$0xf]
      %v230 = vld [vmem:[%s196 + $0x24] sm:$0xf]
      %v231 = vld [vmem:[%s196 + $0x28] sm:$0xf]
      %v232 = vld [vmem:[%s196 + $0x2c] sm:$0xf]
      %v233 = vld [vmem:[%s196 + $0x30] sm:$0xf]
      %v234 = vld [vmem:[%s196 + $0x34] sm:$0xf]
      %v235 = vld [vmem:[%s196 + $0x38] sm:$0xf]
      %v236 = vld [vmem:[%s196 + $0x3c] sm:$0xf]
      %v237 = vld [vmem:[%s0] sm:$0xff]
      %v238 = vld [vmem:[%s0 + $0x8] sm:$0xff]
      %v239 = vld [vmem:[%s0 + $0x10] sm:$0xff]
      %v240 = vld [vmem:[%s0 + $0x18] sm:$0xff]
      %v257 = vunpack.c.l.b16 %v221
      %v258 = vunpack.c.l.b16 %v222
      %v259 = vunpack.c.l.b16 %v223
      %v260 = vunpack.c.l.b16 %v224
      %v261 = vunpack.c.l.b16 %v225
      %v262 = vunpack.c.l.b16 %v226
      %v263 = vunpack.c.l.b16 %v227
      %v264 = vunpack.c.l.b16 %v228
      %v265 = vunpack.c.l.b16 %v229
      %v266 = vunpack.c.l.b16 %v230
      %v267 = vunpack.c.l.b16 %v231
      %v268 = vunpack.c.l.b16 %v232
      %v269 = vunpack.c.l.b16 %v233
      %v270 = vunpack.c.l.b16 %v234
      %v271 = vunpack.c.l.b16 %v235
      %v272 = vunpack.c.l.b16 %v236
      %v273 = vpack.c.b16 %v258, %v257
      %v274 = vpack.c.b16 %v260, %v259
      %v275 = vpack.c.b16 %v262, %v261
      %v276 = vpack.c.b16 %v264, %v263
      %v277 = vpack.c.b16 %v266, %v265
      %v278 = vpack.c.b16 %v268, %v267
      %v279 = vpack.c.b16 %v270, %v269
      %v280 = vpack.c.b16 %v272, %v271
      %v285 = vunpack.c.l.b16 %v237
      %v286 = vunpack.c.h.b16 %v237
      %v287 = vunpack.c.l.b16 %v238
      %v288 = vunpack.c.h.b16 %v238
      %v289 = vunpack.c.l.b16 %v239
      %v290 = vunpack.c.h.b16 %v239
      %v291 = vunpack.c.l.b16 %v240
      %v292 = vunpack.c.h.b16 %v240
      %v293 = vpack.c.b16 %v287, %v285
      %v294 = vpack.c.b16 %v288, %v286
      %v295 = vpack.c.b16 %v291, %v289
      %v296 = vpack.c.b16 %v292, %v290
      %vm301 = vcmask 261120
      %v303 = vsel %vm301, %v273, 0
      %v306 = vsel %vm301, %v274, 0
      %v309 = vsel %vm301, %v275, 0
      %v312 = vsel %vm301, %v276, 0
      %v315 = vsel %vm301, %v277, 0
      %v318 = vsel %vm301, %v278, 0
      %v321 = vsel %vm301, %v279, 0
      %v324 = vsel %vm301, %v280, 0
      %326 = vmatprep.subr.bf16.mxu0 %v294
      %327 = vmatpush1.bf16.msra.mxu0 %v293
      %328 = vmatprep.subr.bf16.mxu0 %v296
      %329 = vmatpush1.bf16.msra.mxu0 %v295
      %330 = vmatprep.subr.bf16.mxu0 0
      %331 = vmatpush1.bf16.msra.mxu0 0
      %332 = vmatprep.subr.bf16.mxu0 0
      %333 = vmatpush1.bf16.msra.mxu0 0
      %334 = vmatprep.subr.bf16.mxu0 0
      %335 = vmatpush1.bf16.msra.mxu0 0
      %336 = vmatprep.subr.bf16.mxu0 0
      %337 = vmatpush1.bf16.msra.mxu0 0
      %338 = vmatprep.subr.bf16.mxu0 0
      %339 = vmatpush1.bf16.msra.mxu0 0
      %340 = vmatprep.subr.bf16.mxu0 0
      %341 = vmatpush1.bf16.msra.mxu0 0
      %342 = vmatprep.subr.bf16.mxu0 0
      %343 = vmatpush1.bf16.msra.mxu0 0
      %344 = vmatprep.subr.bf16.mxu0 0
      %345 = vmatpush1.bf16.msra.mxu0 0
      %346 = vmatprep.subr.bf16.mxu0 0
      %347 = vmatpush1.bf16.msra.mxu0 0
      %348 = vmatprep.subr.bf16.mxu0 0
      %349 = vmatpush1.bf16.msra.mxu0 0
      %350 = vmatprep.subr.bf16.mxu0 0
      %351 = vmatpush1.bf16.msra.mxu0 0
      %352 = vmatprep.subr.bf16.mxu0 0
      %353 = vmatpush1.bf16.msra.mxu0 0
      %354 = vmatprep.subr.bf16.mxu0 0
      %355 = vmatpush1.bf16.msra.mxu0 0
      %356 = vmatprep.subr.bf16.mxu0 0
      %357 = vmatpush1.bf16.msra.mxu0 0
      %358 = vmatprep.mubr.bf16.mxu0 0
      %359 = vmatmul.mubr.bf16.gmra.mrb[0].mxu0 %v303
      %v360 = vpop.f32.mrb[0].mxu0
      %v361 = vadd.f32 0.0, %v360
      %v362 = vpop.f32.mrb[0].mxu0
      %v363 = vadd.f32 0.0, %v362
      %v364 = vpop.f32.mrb[0].mxu0
      %v365 = vadd.f32 0.0, %v364
      %v366 = vpop.f32.mrb[0].mxu0
      %v367 = vadd.f32 0.0, %v366
      %368 = vmatprep.mubr.bf16.mxu0 0
      %369 = vmatmul.mubr.bf16.gmra.mrb[0].mxu0 %v306
      %v370 = vpop.f32.mrb[0].mxu0
      %v371 = vadd.f32 0.0, %v370
      %v372 = vpop.f32.mrb[0].mxu0
      %v373 = vadd.f32 0.0, %v372
      %v374 = vpop.f32.mrb[0].mxu0
      %v375 = vadd.f32 0.0, %v374
      %v376 = vpop.f32.mrb[0].mxu0
      %v377 = vadd.f32 0.0, %v376
      %378 = vmatprep.mubr.bf16.mxu0 0
      %379 = vmatmul.mubr.bf16.gmra.mrb[0].mxu0 %v309
      %v380 = vpop.f32.mrb[0].mxu0
      %v381 = vadd.f32 0.0, %v380
      %v382 = vpop.f32.mrb[0].mxu0
      %v383 = vadd.f32 0.0, %v382
      %v384 = vpop.f32.mrb[0].mxu0
      %v385 = vadd.f32 0.0, %v384
      %v386 = vpop.f32.mrb[0].mxu0
      %v387 = vadd.f32 0.0, %v386
      %388 = vmatprep.mubr.bf16.mxu0 0
      %389 = vmatmul.mubr.bf16.gmra.mrb[0].mxu0 %v312
      %v390 = vpop.f32.mrb[0].mxu0
      %v391 = vadd.f32 0.0, %v390
      %v392 = vpop.f32.mrb[0].mxu0
      %v393 = vadd.f32 0.0, %v392
      %v394 = vpop.f32.mrb[0].mxu0
      %v395 = vadd.f32 0.0, %v394
      %v396 = vpop.f32.mrb[0].mxu0
      %v397 = vadd.f32 0.0, %v396
      %398 = vmatprep.mubr.bf16.mxu0 0
      %399 = vmatmul.mubr.bf16.gmra.mrb[0].mxu0 %v315
      %v400 = vpop.f32.mrb[0].mxu0
      %v401 = vadd.f32 0.0, %v400
      %v402 = vpop.f32.mrb[0].mxu0
      %v403 = vadd.f32 0.0, %v402
      %v404 = vpop.f32.mrb[0].mxu0
      %v405 = vadd.f32 0.0, %v404
      %v406 = vpop.f32.mrb[0].mxu0
      %v407 = vadd.f32 0.0, %v406
      %408 = vmatprep.mubr.bf16.mxu0 0
      %409 = vmatmul.mubr.bf16.gmra.mrb[0].mxu0 %v318
      %v410 = vpop.f32.mrb[0].mxu0
      %v411 = vadd.f32 0.0, %v410
      %v412 = vpop.f32.mrb[0].mxu0
      %v413 = vadd.f32 0.0, %v412
      %v414 = vpop.f32.mrb[0].mxu0
      %v415 = vadd.f32 0.0, %v414
      %v416 = vpop.f32.mrb[0].mxu0
      %v417 = vadd.f32 0.0, %v416
      %418 = vmatprep.mubr.bf16.mxu0 0
      %419 = vmatmul.mubr.bf16.gmra.mrb[0].mxu0 %v321
      %v420 = vpop.f32.mrb[0].mxu0
      %v421 = vadd.f32 0.0, %v420
      %v422 = vpop.f32.mrb[0].mxu0
      %v423 = vadd.f32 0.0, %v422
      %v424 = vpop.f32.mrb[0].mxu0
      %v425 = vadd.f32 0.0, %v424
      %v426 = vpop.f32.mrb[0].mxu0
      %v427 = vadd.f32 0.0, %v426
      %428 = vmatprep.mubr.bf16.mxu0 0
      %429 = vmatmul.mubr.bf16.gmra.mrb[0].mxu0 %v324
      %v430 = vpop.f32.mrb[0].mxu0
      %v431 = vadd.f32 0.0, %v430
      %v432 = vpop.f32.mrb[0].mxu0
      %v433 = vadd.f32 0.0, %v432
      %v434 = vpop.f32.mrb[0].mxu0
      %v435 = vadd.f32 0.0, %v434
      %v436 = vpop.f32.mrb[0].mxu0
      %v437 = vadd.f32 0.0, %v436
      %438 = vdwg.mxu0
      %v439 = vlaneseq
      %v440 = vshrl.u32 %v439, 7
      %v441 = vadd.s32 %v440, 8
      %v442 = vadd.s32 %v440, 16
      %v443 = vadd.s32 %v440, 24
      %v444 = vadd.s32 %v440, 32
      %v445 = vadd.s32 %v440, 40
      %v446 = vadd.s32 %v440, 48
      %v447 = vadd.s32 %v440, 56
      %v448 = vadd.s32 %v440, 64
      %v449 = vadd.s32 %v440, 72
      %v450 = vadd.s32 %v440, 80
      %v451 = vadd.s32 %v440, 88
      %v452 = vadd.s32 %v440, 96
      %v453 = vadd.s32 %v440, 104
      %v454 = vadd.s32 %v440, 112
      %v455 = vadd.s32 %v440, 120
      %s456 = smul.u32 %s220, 128
      %s457 = ssub.s32 456, %s456
      %v458 = vstv %s457
      %vm459 = vcmp.lt.s32.totalorder %v440, %v458
      %vm460 = vcmp.lt.s32.totalorder %v441, %v458
      %vm461 = vcmp.lt.s32.totalorder %v442, %v458
      %vm462 = vcmp.lt.s32.totalorder %v443, %v458
      %vm463 = vcmp.lt.s32.totalorder %v444, %v458
      %vm464 = vcmp.lt.s32.totalorder %v445, %v458
      %vm465 = vcmp.lt.s32.totalorder %v446, %v458
      %vm466 = vcmp.lt.s32.totalorder %v447, %v458
      %vm467 = vcmp.lt.s32.totalorder %v448, %v458
      %vm468 = vcmp.lt.s32.totalorder %v449, %v458
      %vm469 = vcmp.lt.s32.totalorder %v450, %v458
      %vm470 = vcmp.lt.s32.totalorder %v451, %v458
      %vm471 = vcmp.lt.s32.totalorder %v452, %v458
      %vm472 = vcmp.lt.s32.totalorder %v453, %v458
      %vm473 = vcmp.lt.s32.totalorder %v454, %v458
      %vm474 = vcmp.lt.s32.totalorder %v455, %v458
      %v475 = vsel %vm459, %v361, -inf
      %v476 = vsel %vm459, %v363, -inf
      %v477 = vsel %vm460, %v365, -inf
      %v478 = vsel %vm460, %v367, -inf
      %v479 = vsel %vm461, %v371, -inf
      %v480 = vsel %vm461, %v373, -inf
      %v481 = vsel %vm462, %v375, -inf
      %v482 = vsel %vm462, %v377, -inf
      %v483 = vsel %vm463, %v381, -inf
      %v484 = vsel %vm463, %v383, -inf
      %v485 = vsel %vm464, %v385, -inf
      %v486 = vsel %vm464, %v387, -inf
      %v487 = vsel %vm465, %v391, -inf
      %v488 = vsel %vm465, %v393, -inf
      %v489 = vsel %vm466, %v395, -inf
      %v490 = vsel %vm466, %v397, -inf
      %v491 = vsel %vm467, %v401, -inf
      %v492 = vsel %vm467, %v403, -inf
      %v493 = vsel %vm468, %v405, -inf
      %v494 = vsel %vm468, %v407, -inf
      %v495 = vsel %vm469, %v411, -inf
      %v496 = vsel %vm469, %v413, -inf
      %v497 = vsel %vm470, %v415, -inf
      %v498 = vsel %vm470, %v417, -inf
      %v499 = vsel %vm471, %v421, -inf
      %v500 = vsel %vm471, %v423, -inf
      %v501 = vsel %vm472, %v425, -inf
      %v502 = vsel %vm472, %v427, -inf
      %v503 = vsel %vm473, %v431, -inf
      %v504 = vsel %vm473, %v433, -inf
      %v505 = vsel %vm474, %v435, -inf
      %v506 = vsel %vm474, %v437, -inf
      %v507 = vmax.f32 %v475, %v479
      %v508 = vmax.f32 %v477, %v481
      %v509 = vmax.f32 %v507, %v483
      %v510 = vmax.f32 %v508, %v485
      %v511 = vmax.f32 %v509, %v487
      %v512 = vmax.f32 %v510, %v489
      %v513 = vmax.f32 %v511, %v491
      %v514 = vmax.f32 %v512, %v493
      %v515 = vmax.f32 %v513, %v495
      %v516 = vmax.f32 %v514, %v497
      %v517 = vmax.f32 %v515, %v499
      %v518 = vmax.f32 %v516, %v501
      %v519 = vmax.f32 %v517, %v503
      %v520 = vmax.f32 %v518, %v505
      %v521 = vmax.f32 %v519, %v520
      %v522 = vrot.slane %v521, 4
      %v523 = vmax.f32 %v521, %v522
      %v524 = vrot.slane %v523, 2
      %v525 = vmax.f32 %v523, %v524
      %v526 = vrot.slane %v525, 1
      %v527 = vmax.f32 %v525, %v526
      %v528 = vmax.f32 %v476, %v480
      %v529 = vmax.f32 %v478, %v482
      %v530 = vmax.f32 %v528, %v484
      %v531 = vmax.f32 %v529, %v486
      %v532 = vmax.f32 %v530, %v488
      %v533 = vmax.f32 %v531, %v490
      %v534 = vmax.f32 %v532, %v492
      %v535 = vmax.f32 %v533, %v494
      %v536 = vmax.f32 %v534, %v496
      %v537 = vmax.f32 %v535, %v498
      %v538 = vmax.f32 %v536, %v500
      %v539 = vmax.f32 %v537, %v502
      %v540 = vmax.f32 %v538, %v504
      %v541 = vmax.f32 %v539, %v506
      %v542 = vmax.f32 %v540, %v541
      %v543 = vrot.slane %v542, 4
      %v544 = vmax.f32 %v542, %v543
      %v545 = vrot.slane %v544, 2
      %v546 = vmax.f32 %v544, %v545
      %v547 = vrot.slane %v546, 1
      %v548 = vmax.f32 %v546, %v547
      %vm549 = vcmp.eq.f32.partialorder %v475, %v527
      %vm550 = vcmp.eq.f32.partialorder %v476, %v548
      %vm551 = vcmp.eq.f32.partialorder %v477, %v527
      %vm552 = vcmp.eq.f32.partialorder %v478, %v548
      %vm553 = vcmp.eq.f32.partialorder %v479, %v527
      %vm554 = vcmp.eq.f32.partialorder %v480, %v548
      %vm555 = vcmp.eq.f32.partialorder %v481, %v527
      %vm556 = vcmp.eq.f32.partialorder %v482, %v548
      %vm557 = vcmp.eq.f32.partialorder %v483, %v527
      %vm558 = vcmp.eq.f32.partialorder %v484, %v548
      %vm559 = vcmp.eq.f32.partialorder %v485, %v527
      %vm560 = vcmp.eq.f32.partialorder %v486, %v548
      %vm561 = vcmp.eq.f32.partialorder %v487, %v527
      %vm562 = vcmp.eq.f32.partialorder %v488, %v548
      %vm563 = vcmp.eq.f32.partialorder %v489, %v527
      %vm564 = vcmp.eq.f32.partialorder %v490, %v548
      %vm565 = vcmp.eq.f32.partialorder %v491, %v527
      %vm566 = vcmp.eq.f32.partialorder %v492, %v548
      %vm567 = vcmp.eq.f32.partialorder %v493, %v527
      %vm568 = vcmp.eq.f32.partialorder %v494, %v548
      %vm569 = vcmp.eq.f32.partialorder %v495, %v527
      %vm570 = vcmp.eq.f32.partialorder %v496, %v548
      %vm571 = vcmp.eq.f32.partialorder %v497, %v527
      %vm572 = vcmp.eq.f32.partialorder %v498, %v548
      %vm573 = vcmp.eq.f32.partialorder %v499, %v527
      %vm574 = vcmp.eq.f32.partialorder %v500, %v548
      %vm575 = vcmp.eq.f32.partialorder %v501, %v527
      %vm576 = vcmp.eq.f32.partialorder %v502, %v548
      %vm577 = vcmp.eq.f32.partialorder %v503, %v527
      %vm578 = vcmp.eq.f32.partialorder %v504, %v548
      %vm579 = vcmp.eq.f32.partialorder %v505, %v527
      %vm580 = vcmp.eq.f32.partialorder %v506, %v548
      %v581 = vsel %vm549, %v440, 2147483647
      %v582 = vsel %vm550, %v440, 2147483647
      %v583 = vsel %vm551, %v441, 2147483647
      %v584 = vsel %vm552, %v441, 2147483647
      %v585 = vsel %vm553, %v442, 2147483647
      %v586 = vsel %vm554, %v442, 2147483647
      %v587 = vsel %vm555, %v443, 2147483647
      %v588 = vsel %vm556, %v443, 2147483647
      %v589 = vsel %vm557, %v444, 2147483647
      %v590 = vsel %vm558, %v444, 2147483647
      %v591 = vsel %vm559, %v445, 2147483647
      %v592 = vsel %vm560, %v445, 2147483647
      %v593 = vsel %vm561, %v446, 2147483647
      %v594 = vsel %vm562, %v446, 2147483647
      %v595 = vsel %vm563, %v447, 2147483647
      %v596 = vsel %vm564, %v447, 2147483647
      %v597 = vsel %vm565, %v448, 2147483647
      %v598 = vsel %vm566, %v448, 2147483647
      %v599 = vsel %vm567, %v449, 2147483647
      %v600 = vsel %vm568, %v449, 2147483647
      %v601 = vsel %vm569, %v450, 2147483647
      %v602 = vsel %vm570, %v450, 2147483647
      %v603 = vsel %vm571, %v451, 2147483647
      %v604 = vsel %vm572, %v451, 2147483647
      %v605 = vsel %vm573, %v452, 2147483647
      %v606 = vsel %vm574, %v452, 2147483647
      %v607 = vsel %vm575, %v453, 2147483647
      %v608 = vsel %vm576, %v453, 2147483647
      %v609 = vsel %vm577, %v454, 2147483647
      %v610 = vsel %vm578, %v454, 2147483647
      %v611 = vsel %vm579, %v455, 2147483647
      %v612 = vsel %vm580, %v455, 2147483647
      %vm613 = vcmp.lt.s32.totalorder %v581, %v585
      %v614 = vsel %vm613, %v581, %v585
      %vm615 = vcmp.lt.s32.totalorder %v583, %v587
      %v616 = vsel %vm615, %v583, %v587
      %vm617 = vcmp.lt.s32.totalorder %v614, %v589
      %v618 = vsel %vm617, %v614, %v589
      %vm619 = vcmp.lt.s32.totalorder %v616, %v591
      %v620 = vsel %vm619, %v616, %v591
      %vm621 = vcmp.lt.s32.totalorder %v618, %v593
      %v622 = vsel %vm621, %v618, %v593
      %vm623 = vcmp.lt.s32.totalorder %v620, %v595
      %v624 = vsel %vm623, %v620, %v595
      %vm625 = vcmp.lt.s32.totalorder %v622, %v597
      %v626 = vsel %vm625, %v622, %v597
      %vm627 = vcmp.lt.s32.totalorder %v624, %v599
      %v628 = vsel %vm627, %v624, %v599
      %vm629 = vcmp.lt.s32.totalorder %v626, %v601
      %v630 = vsel %vm629, %v626, %v601
      %vm631 = vcmp.lt.s32.totalorder %v628, %v603
      %v632 = vsel %vm631, %v628, %v603
      %vm633 = vcmp.lt.s32.totalorder %v630, %v605
      %v634 = vsel %vm633, %v630, %v605
      %vm635 = vcmp.lt.s32.totalorder %v632, %v607
      %v636 = vsel %vm635, %v632, %v607
      %vm637 = vcmp.lt.s32.totalorder %v634, %v609
      %v638 = vsel %vm637, %v634, %v609
      %vm639 = vcmp.lt.s32.totalorder %v636, %v611
      %v640 = vsel %vm639, %v636, %v611
      %vm641 = vcmp.lt.s32.totalorder %v638, %v640
      %v642 = vsel %vm641, %v638, %v640
      %v643 = vrot.slane %v642, 4
      %vm644 = vcmp.lt.s32.totalorder %v642, %v643
      %v645 = vsel %vm644, %v642, %v643
      %v646 = vrot.slane %v645, 2
      %vm647 = vcmp.lt.s32.totalorder %v645, %v646
      %v648 = vsel %vm647, %v645, %v646
      %v649 = vrot.slane %v648, 1
      %vm650 = vcmp.lt.s32.totalorder %v648, %v649
      %v651 = vsel %vm650, %v648, %v649
      %vm652 = vcmp.lt.s32.totalorder %v582, %v586
      %v653 = vsel %vm652, %v582, %v586
      %vm654 = vcmp.lt.s32.totalorder %v584, %v588
      %v655 = vsel %vm654, %v584, %v588
      %vm656 = vcmp.lt.s32.totalorder %v653, %v590
      %v657 = vsel %vm656, %v653, %v590
      %vm658 = vcmp.lt.s32.totalorder %v655, %v592
      %v659 = vsel %vm658, %v655, %v592
      %vm660 = vcmp.lt.s32.totalorder %v657, %v594
      %v661 = vsel %vm660, %v657, %v594
      %vm662 = vcmp.lt.s32.totalorder %v659, %v596
      %v663 = vsel %vm662, %v659, %v596
      %vm664 = vcmp.lt.s32.totalorder %v661, %v598
      %v665 = vsel %vm664, %v661, %v598
      %vm666 = vcmp.lt.s32.totalorder %v663, %v600
      %v667 = vsel %vm666, %v663, %v600
      %vm668 = vcmp.lt.s32.totalorder %v665, %v602
      %v669 = vsel %vm668, %v665, %v602
      %vm670 = vcmp.lt.s32.totalorder %v667, %v604
      %v671 = vsel %vm670, %v667, %v604
      %vm672 = vcmp.lt.s32.totalorder %v669, %v606
      %v673 = vsel %vm672, %v669, %v606
      %vm674 = vcmp.lt.s32.totalorder %v671, %v608
      %v675 = vsel %vm674, %v671, %v608
      %vm676 = vcmp.lt.s32.totalorder %v673, %v610
      %v677 = vsel %vm676, %v673, %v610
      %vm678 = vcmp.lt.s32.totalorder %v675, %v612
      %v679 = vsel %vm678, %v675, %v612
      %vm680 = vcmp.lt.s32.totalorder %v677, %v679
      %v681 = vsel %vm680, %v677, %v679
      %v682 = vrot.slane %v681, 4
      %vm683 = vcmp.lt.s32.totalorder %v681, %v682
      %v684 = vsel %vm683, %v681, %v682
      %v685 = vrot.slane %v684, 2
      %vm686 = vcmp.lt.s32.totalorder %v684, %v685
      %v687 = vsel %vm686, %v684, %v685
      %v688 = vrot.slane %v687, 1
      %vm689 = vcmp.lt.s32.totalorder %v687, %v688
      %v690 = vsel %vm689, %v687, %v688
      %v691 = vstv %s456
      %v692 = vadd.s32 %v651, %v691
      %v693 = vadd.s32 %v690, %v691
      %v694 = vld [vmem:[#allocation2] sm:$0x3]
      %v696 = vlaneseq
      %v697 = vshrl.u32 %v696, 7
      %v698 = vsub.s32 0, %v697
      %v699 = vrot.slane %v694, %v698
      %v700 = vlaneseq
      %v701 = vshrl.u32 %v700, 7
      %v702 = vsub.s32 1, %v701
      %v703 = vrot.slane %v694, %v702
      %vm706 = vcmp.gt.f32.partialorder %v527, %v699
      %vm707 = vcmp.gt.f32.partialorder %v548, %v703
      %v708 = vld [vmem:[#allocation3] sm:$0x3]
      %v709 = vlaneseq
      %v710 = vshrl.u32 %v709, 7
      %v711 = vsub.s32 0, %v710
      %v712 = vrot.slane %v708, %v711
      %v713 = vlaneseq
      %v714 = vshrl.u32 %v713, 7
      %v715 = vsub.s32 1, %v714
      %v716 = vrot.slane %v708, %v715
      %v717 = vsel %vm706, %v692, %v712
      %v718 = vsel %vm707, %v693, %v716
      %v719 = vcombine.low %v717, %v718
      %v721 = vunpack.c.l.s4 1966171168
      %v722 = vunpack.c.0.s8 %v721
      %v723 = vlaneseq
      %v724 = vshrl.u32 %v723, 7
      %v725 = vsub.s32 %v722, %v724
      %v726 = vrot.slane %v719, %v725
      %v728 = vunpack.c.l.s4 1966171168
      %v729 = vunpack.c.0.s8 %v728
      %v730 = vlaneseq
      %v731 = vshrl.u32 %v730, 7
      %v732 = vsub.s32 %v729, %v731
      %v733 = vrot.slane %v726, %v732
      %v734 = vlaneseq
      %vm735 = vcmp.ge.s32.totalorder %v734, 0
      %vm736 = vcmp.lt.s32.totalorder %v734, 256
      %vm737 = vmand %vm735, %vm736
      %738 = vst.msk [vmem:[#allocation3] sm:$0x3] %vm737, %v733
      %v739 = vld [vmem:[#allocation2] sm:$0x3]
      %v741 = vlaneseq
      %v742 = vshrl.u32 %v741, 7
      %v743 = vsub.s32 0, %v742
      %v744 = vrot.slane %v739, %v743
      %v745 = vlaneseq
      %v746 = vshrl.u32 %v745, 7
      %v747 = vsub.s32 1, %v746
      %v748 = vrot.slane %v739, %v747
      %v751 = vsel %vm706, %v527, %v744
      %v752 = vsel %vm707, %v548, %v748
      %v755 = vcombine.low %v751, %v752
      %v757 = vunpack.c.l.s4 1966171168
      %v758 = vunpack.c.0.s8 %v757
      %v759 = vlaneseq
      %v760 = vshrl.u32 %v759, 7
      %v761 = vsub.s32 %v758, %v760
      %v762 = vrot.slane %v755, %v761
      %v764 = vunpack.c.l.s4 1966171168
      %v765 = vunpack.c.0.s8 %v764
      %v766 = vlaneseq
      %v767 = vshrl.u32 %v766, 7
      %v768 = vsub.s32 %v765, %v767
      %v769 = vrot.slane %v762, %v768
      %771 = vst.msk [vmem:[#allocation2] sm:$0x3] %vm737, %v769
      %p772 = scmp.eq.s32.totalorder %s20, 1
      // Predicated region
      $region33: #{dialect_clip_eval_step.1} parent=27 // pred_check
        %p773 = pneg %p772
      $region34: #{dialect_clip_eval_step.1} parent=27 // pred_check_branch
        %775 = sbr.rel (%p773) target = $region36
      $region35: #{dialect_clip_eval_step.1} parent=27 // pred_region
        %v776 = vld [vmem:[#allocation2] sm:$0x3]
        %777 = vst.msk [vmem:[%s203] sm:$0x3] %vm737, %v776
        %v778 = vld [vmem:[#allocation3] sm:$0x3]
        %779 = vst.msk [vmem:[%s207] sm:$0x3] %vm737, %v778
      $region36: #{dialect_clip_eval_step.1} parent=27 // pred_fallthru
        _
      %p780 = scmp.lt.s32.totalorder %s19, 1
      %s781 = scalar_select %p780, %s19, 1
      %s782 = smul.addr %s781, 2
      %s783 = scalar_lea.vmem %s2, %s782
      %p784 = scmp.lt.s32.totalorder %s19, 1
      %s785 = scalar_select %p784, %s19, 1
      %s786 = smul.addr %s785, 2
      %s787 = scalar_lea.vmem %s3, %s786
      // Predicated region
      $region37: #{dialect_clip_eval_step.1} parent=27 // pred_check
        %p788 = pneg %p96
      $region38: #{dialect_clip_eval_step.1} parent=27 // pred_check_branch
        %790 = sbr.rel (%p788) target = $region40
      $region39: #{dialect_clip_eval_step.1} parent=27 // pred_region
        _
      $region40: #{dialect_clip_eval_step.1} parent=27 // pred_fallthru
        _
      // Predicated region
      $region41: #{dialect_clip_eval_step.1} parent=27 // pred_check
        %p791 = pneg %p122
      $region42: #{dialect_clip_eval_step.1} parent=27 // pred_check_branch
        %793 = sbr.rel (%p791) target = $region44
      $region43: #{dialect_clip_eval_step.1} parent=27 // pred_region
        _
      $region44: #{dialect_clip_eval_step.1} parent=27 // pred_fallthru
        _
    $region28: #{dialect_clip_eval_step.1} parent=5 // pred_fallthru
      _
    %p794 = scmp.le.s32.totalorder 2, %s10
    // Predicated region
    $region45: #{dialect_clip_eval_step.1} parent=5 // pred_check
      %p795 = pneg %p794
    $region46: #{dialect_clip_eval_step.1} parent=5 // pred_check_branch
      %797 = sbr.rel (%p795) target = $region48
    $region47: #{dialect_clip_eval_step.1} parent=5 // pred_region
      %s798 = ssub.s32 %s10, 2
      // Predicated region
      $region49: #{dialect_clip_eval_step.1} parent=47 // pred_check
        %p799 = pneg %p102
      $region50: #{dialect_clip_eval_step.1} parent=47 // pred_check_branch
        %801 = sbr.rel (%p799) target = $region52
      $region51: #{dialect_clip_eval_step.1} parent=47 // pred_region
        %p802 = scmp.lt.s32.totalorder %s21, 1
        %s803 = scalar_select %p802, %s21, 1
        %s804 = smul.addr %s803, 2
        %s805 = scalar_lea.vmem %s2, %s804
      $region52: #{dialect_clip_eval_step.1} parent=47 // pred_fallthru
        _
      // Predicated region
      $region53: #{dialect_clip_eval_step.1} parent=47 // pred_check
        %p806 = pneg %p128
      $region54: #{dialect_clip_eval_step.1} parent=47 // pred_check_branch
        %808 = sbr.rel (%p806) target = $region56
      $region55: #{dialect_clip_eval_step.1} parent=47 // pred_region
        %p809 = scmp.lt.s32.totalorder %s21, 1
        %s810 = scalar_select %p809, %s21, 1
        %s811 = smul.addr %s810, 2
        %s812 = scalar_lea.vmem %s3, %s811
      $region56: #{dialect_clip_eval_step.1} parent=47 // pred_fallthru
        _
    $region48: #{dialect_clip_eval_step.1} parent=5 // pred_fallthru
      _
  $region6: #{dialect_clip_eval_step.1} parent=0 // loop_footer
    %s14 = sadd.s32 1, %s10
  $region7: #{dialect_clip_eval_step.1} parent=0 // loop_footer_branch
    %9 = sbr.rel target = $region3
  $region8: #{dialect_clip_eval_step.1} parent=0 // loop_exit
    _

</llo_original>
